<compile_context>
chip_gen: v7x
topology: tpu7x:2x2x1
jax: 0.10.0
libtpu: 0.0.40
codegen_flags: <defaults>
</compile_context>

<pallas_src>
import math
from functools import partial

import jax
import jax.numpy as jnp
from jax.experimental import pallas as pl
from jax.experimental.pallas import tpu as pltpu


def _fpb_kernel(x_ref, w1_ref, b1_ref, w3_ref, b3_ref, mask_ref, o_ref,
                *, W, Cb, L, dilations):
    # ---- all four 1x1 conv branches in one MXU matmul (bf16 operands) ----
    x = x_ref[...].astype(jnp.bfloat16)                         # (Cin, L)
    w1 = w1_ref[...].astype(jnp.bfloat16)                       # (4*Cb, Cin)
    inter = jnp.dot(w1, x, preferred_element_type=jnp.float32) + b1_ref[...]
    inter = jnp.maximum(inter, 0.0)                             # (4*Cb, L) f32

    # branch 1 has no second conv: write its chunk directly (single store).
    o_ref[0:Cb, :] = inter[0:Cb].astype(o_ref.dtype)

    # ---- branches 2..4: dilated 3x3 conv as ONE stacked matmul per branch ----
    for bi, d in enumerate(dilations):
        src = inter[(bi + 1) * Cb:(bi + 2) * Cb]                # (Cb, L) f32
        slabs = []
        for ki in range(3):
            for kj in range(3):
                t = ki * 3 + kj
                off = (ki - 1) * d * W + (kj - 1) * d
                shift = (-off) % L
                # one sublane-stacked lane roll per tap (whole Cb-channel block)
                rolled = src if shift == 0 else pltpu.roll(src, shift, axis=1)
                # input-side masking (pre-broadcast f32 0/1 mask) -> MXU does the
                # tap accumulation, no post-matmul VALU adds.
                slabs.append(rolled * mask_ref[bi * 9 + t])
        stacked = jnp.concatenate(slabs, axis=0).astype(jnp.bfloat16)   # (9*Cb, L)
        w3 = w3_ref[bi].astype(jnp.bfloat16)                            # (Cb, 9*Cb)
        out = jnp.dot(w3, stacked, preferred_element_type=jnp.float32) + b3_ref[bi]
        out = jnp.maximum(out, 0.0)
        o_ref[(bi + 1) * Cb:(bi + 2) * Cb, :] = out.astype(o_ref.dtype)


def feature_pyramid_pallas(x, w1_all, b1_all, w3_all, b3_all,
                           *, dilations=(1, 2, 4), num_groups=None):
    """x: (N, Cin, H, W) f32.
       w1_all: (4*Cb, Cin)        BN-folded, branch-stacked 1x1 weights
       b1_all: (4*Cb,)            BN-folded, branch-stacked 1x1 biases
       w3_all: (3, Cb, 9*Cb)      BN-folded 3x3 weights, lane-dense (col block t = kh*3+kw)
       b3_all: (3, Cb)            BN-folded 3x3 biases"""
    N, Cin, H, W = x.shape
    HW = H * W
    C4 = w1_all.shape[0]
    Cb = C4 // 4
    nbr = len(dilations)
    d_max = max(dilations)
    # roll+mask correctness guard (wrapped lanes must always be masked lanes)
    assert H > 2 * d_max and W > 2 * d_max, "spatial size too small for roll+mask scheme"

    if num_groups is None:
        # 2 parallel grid steps when possible (keeps both v7x TensorCores busy);
        # pass num_groups=1 on v5e/v6e to fold the whole batch into one step.
        num_groups = 2 if (N % 2 == 0 and N >= 2) else 1
    assert N % num_groups == 0
    G = num_groups
    nb = N // G                      # images folded into the lane axis per group
    L = nb * HW

    # (N, Cin, H, W) -> (G, Cin, nb*HW): channels on sublanes, lane-dense groups
    x_flat = (x.reshape(G, nb, Cin, HW)
               .transpose(0, 2, 1, 3)
               .reshape(G, Cin, L))

    b1_col = b1_all.reshape(C4, 1).astype(jnp.float32)
    b3_col = b3_all.reshape(nbr, Cb, 1).astype(jnp.float32)

    # ---- precompute boundary masks (f32 0/1), pre-broadcast over Cb sublanes and
    # tiled over the nb images folded into the lane axis ----
    p = jnp.arange(HW, dtype=jnp.int32)
    hh = p // W
    ww = p % W
    rows = []
    for d in dilations:
        for ki in range(3):
            for kj in range(3):
                di = (ki - 1) * d
                dj = (kj - 1) * d
                valid = ((hh + di >= 0) & (hh + di < H) &
                         (ww + dj >= 0) & (ww + dj < W))
                rows.append(valid.astype(jnp.float32))
    masks = jnp.stack(rows)                              # (27, HW)
    masks = jnp.tile(masks[:, None, :], (1, Cb, nb))     # (27, Cb, L)

    kernel = partial(_fpb_kernel, W=W, Cb=Cb, L=L, dilations=dilations)

    flops = int(2 * N * HW * (C4 * Cin + nbr * Cb * 9 * Cb))
    bytes_accessed = int(4 * (x_flat.size + G * C4 * L + masks.size
                              + w1_all.size + b1_all.size + w3_all.size + b3_all.size))

    out = pl.pallas_call(
        kernel,
        out_shape=jax.ShapeDtypeStruct((G, C4, L), x.dtype),
        grid=(G,),
        in_specs=[
            pl.BlockSpec((None, Cin, L), lambda g: (g, 0, 0)),     # x (group-squeezed)
            pl.BlockSpec((C4, Cin), lambda g: (0, 0)),             # stacked 1x1 weights
            pl.BlockSpec((C4, 1), lambda g: (0, 0)),               # stacked 1x1 biases
            pl.BlockSpec(w3_all.shape, lambda g: (0, 0, 0)),       # lane-dense 3x3 weights
            pl.BlockSpec(b3_col.shape, lambda g: (0, 0, 0)),       # 3x3 biases
            pl.BlockSpec(masks.shape, lambda g: (0, 0, 0)),        # precomputed masks
        ],
        out_specs=pl.BlockSpec((None, C4, L), lambda g: (g, 0, 0)),
        compiler_params=pltpu.CompilerParams(
            dimension_semantics=("parallel",)),
        cost_estimate=pl.CostEstimate(
            flops=flops, transcendentals=0, bytes_accessed=bytes_accessed),
    )(x_flat, w1_all, b1_col, w3_all, b3_col, masks)

    # (G, C4, nb*HW) -> (N, C4, H, W)
    return (out.reshape(G, C4, nb, H, W)
               .transpose(0, 2, 1, 3, 4)
               .reshape(N, C4, H, W))


# ---------------- parameter helpers (BN folding, matching PyTorch semantics) ----------------
def fold_and_pack(params, eps=1e-5):
    w1_list, b1_list, w3_list, b3_list = [], [], [], []
    for bi in range(4):
        p = params[f"branch{bi + 1}"]
        g, b, m, v = p["bn1"]
        s = g / jnp.sqrt(v + eps)
        w1_list.append(p["w1"] * s[:, None])
        b1_list.append((p["b1"] - m) * s + b)
        if bi >= 1:
            g2, b2, m2, v2 = p["bn2"]
            s2 = g2 / jnp.sqrt(v2 + eps)
            w3f = p["w3"] * s2[:, None, None, None]        # (Cb_out, Cb_in, 3, 3)
            b3f = (p["b3"] - m2) * s2 + b2
            Cb = w3f.shape[0]
            # lane-dense per-branch packing: (Cb_out, 9*Cb_in), column block t = kh*3+kw
            w3_list.append(jnp.transpose(w3f, (0, 2, 3, 1)).reshape(Cb, 9 * Cb))
            b3_list.append(b3f)
    w1_all = jnp.concatenate(w1_list, axis=0)
    b1_all = jnp.concatenate(b1_list, axis=0)
    w3_all = jnp.stack(w3_list, axis=0)      # (3, Cb, 9*Cb)
    b3_all = jnp.stack(b3_list, axis=0)      # (3, Cb)
    return w1_all, b1_all, w3_all, b3_all


def make_params(key, Cin, Cb):
    params = {}
    keys = jax.random.split(key, 4)
    for bi in range(4):
        ks = jax.random.split(keys[bi], 12)
        p = {
            "w1": jax.random.normal(ks[0], (Cb, Cin), jnp.float32) / math.sqrt(Cin),
            "b1": jax.random.normal(ks[1], (Cb,), jnp.float32) * 0.1,
            "bn1": (jax.random.uniform(ks[2], (Cb,), jnp.float32, 0.5, 1.5),
                    jax.random.normal(ks[3], (Cb,), jnp.float32) * 0.1,
                    jax.random.normal(ks[4], (Cb,), jnp.float32) * 0.1,
                    jax.random.uniform(ks[5], (Cb,), jnp.float32, 0.5, 1.5)),
        }
        if bi >= 1:
            p["w3"] = jax.random.normal(ks[6], (Cb, Cb, 3, 3), jnp.float32) / math.sqrt(Cb * 9)
            p["b3"] = jax.random.normal(ks[7], (Cb,), jnp.float32) * 0.1
            p["bn2"] = (jax.random.uniform(ks[8], (Cb,), jnp.float32, 0.5, 1.5),
                        jax.random.normal(ks[9], (Cb,), jnp.float32) * 0.1,
                        jax.random.normal(ks[10], (Cb,), jnp.float32) * 0.1,
                        jax.random.uniform(ks[11], (Cb,), jnp.float32, 0.5, 1.5))
        params[f"branch{bi + 1}"] = p
    return params


# ---------------- pure-JAX reference (matches the PyTorch module, BN in eval mode) ----------------
def feature_pyramid_ref(x, params, *, dilations=(1, 2, 4), eps=1e-5):
    def bn(y, g, b, m, v):
        return (g[None, :, None, None] * (y - m[None, :, None, None])
                / jnp.sqrt(v[None, :, None, None] + eps) + b[None, :, None, None])

    outs = []
    for bi in range(4):
        p = params[f"branch{bi + 1}"]
        y = jnp.einsum("nchw,oc->nohw", x, p["w1"],
                       precision=jax.lax.Precision.HIGHEST) + p["b1"][None, :, None, None]
        y = jnp.maximum(bn(y, *p["bn1"]), 0.0)
        if bi >= 1:
            d = dilations[bi - 1]
            y = jax.lax.conv_general_dilated(
                y, p["w3"], window_strides=(1, 1),
                padding=[(d, d), (d, d)], rhs_dilation=(d, d),
                dimension_numbers=("NCHW", "OIHW", "NCHW"),
                precision=jax.lax.Precision.HIGHEST) + p["b3"][None, :, None, None]
            y = jnp.maximum(bn(y, *p["bn2"]), 0.0)
        outs.append(y)
    return jnp.concatenate(outs, axis=1)


if __name__ == "__main__":
    # small shapes consistent with the module: in_channels=8, out_channels=32 (Cb=8), 16x16 maps
    N, Cin, Cout, H, W = 2, 8, 32, 16, 16
    Cb = Cout // 4

    key = jax.random.PRNGKey(0)
    kx, kp = jax.random.split(key)
    x = jax.random.normal(kx, (N, Cin, H, W), dtype=jnp.float32)
    params = make_params(kp, Cin, Cb)
    w1_all, b1_all, w3_all, b3_all = fold_and_pack(params)

    ref = feature_pyramid_ref(x, params)
    scale = float(jnp.max(jnp.abs(ref))) + 1.0
    tol = 2e-2 * scale   # bf16 MXU operands vs f32 HIGHEST reference

    # default: 2 parallel lane-dense grid steps (good for v7x's 2 TensorCores)
    out = jax.jit(feature_pyramid_pallas)(x, w1_all, b1_all, w3_all, b3_all)
    out = jax.block_until_ready(out)
    # fully batch-folded variant: whole batch on the lane axis, one grid step (v5e/v6e)
    out1 = jax.jit(partial(feature_pyramid_pallas, num_groups=1))(
        x, w1_all, b1_all, w3_all, b3_all)
    out1 = jax.block_until_ready(out1)

    err = float(jnp.max(jnp.abs(out - ref)))
    err1 = float(jnp.max(jnp.abs(out1 - ref)))
    if out.shape != (N, Cout, H, W) or not (err < tol and err1 < tol):
        raise RuntimeError(
            f"mismatch: shape={out.shape}, err={err}, err_folded={err1}, tol={tol}")
    print("KERNEL_OK")
</pallas_src>

<mosaic_0001>
module attributes {stable_mosaic.version = 11 : i64} {
  func.func @_fpb_kernel(%arg0: i32, %arg1: memref<1x8x256xf32, #tpu.memory_space<vmem>>, %arg2: memref<32x8xf32, #tpu.memory_space<vmem>>, %arg3: memref<32x1xf32, #tpu.memory_space<vmem>>, %arg4: memref<3x8x72xf32, #tpu.memory_space<vmem>>, %arg5: memref<3x8x1xf32, #tpu.memory_space<vmem>>, %arg6: memref<27x8x256xf32, #tpu.memory_space<vmem>>, %arg7: memref<1x32x256xf32, #tpu.memory_space<vmem>>) attributes {dimension_semantics = [#tpu.dimension_semantics<parallel>], iteration_bounds = array<i64: 2>, scalar_prefetch = 0 : i64, scratch_operands = 0 : i64, tpu.core_type = #tpu.core_type<tc>, window_params = [{transform_indices = @transform_0, window_bounds = array<i64: 1, 8, 256>}, {pipeline_mode = #tpu.pipeline_mode<synchronous>, transform_indices = @transform_1, window_bounds = array<i64: 32, 8>}, {pipeline_mode = #tpu.pipeline_mode<synchronous>, transform_indices = @transform_2, window_bounds = array<i64: 32, 1>}, {pipeline_mode = #tpu.pipeline_mode<synchronous>, transform_indices = @transform_3, window_bounds = array<i64: 3, 8, 72>}, {pipeline_mode = #tpu.pipeline_mode<synchronous>, transform_indices = @transform_4, window_bounds = array<i64: 3, 8, 1>}, {pipeline_mode = #tpu.pipeline_mode<synchronous>, transform_indices = @transform_5, window_bounds = array<i64: 27, 8, 256>}, {transform_indices = @transform_6, window_bounds = array<i64: 1, 32, 256>}]} {
    %c0 = arith.constant 0 : index
    %c0_0 = arith.constant 0 : index
    %c0_1 = arith.constant 0 : index
    %0 = vector.load %arg1[%c0, %c0_0, %c0_1] : memref<1x8x256xf32, #tpu.memory_space<vmem>>, vector<1x8x256xf32>
    %1 = vector.shape_cast %0 : vector<1x8x256xf32> to vector<8x256xf32>
    %2 = arith.truncf %1 : vector<8x256xf32> to vector<8x256xbf16>
    %c0_2 = arith.constant 0 : index
    %c0_3 = arith.constant 0 : index
    %3 = vector.load %arg2[%c0_2, %c0_3] : memref<32x8xf32, #tpu.memory_space<vmem>>, vector<32x8xf32>
    %4 = arith.truncf %3 : vector<32x8xf32> to vector<32x8xbf16>
    %cst = arith.constant dense<0.000000e+00> : vector<32x256xf32>
    %5 = tpu.matmul %4, %2, %cst {dimension_numbers = #tpu.dot_dimension_numbers<[1], [0], [0], [1], [0, 0, 1, 1], [], []>} : vector<32x8xbf16>, vector<8x256xbf16>, vector<32x256xf32> -> vector<32x256xf32>
    %c0_4 = arith.constant 0 : index
    %c0_5 = arith.constant 0 : index
    %6 = vector.load %arg3[%c0_4, %c0_5] : memref<32x1xf32, #tpu.memory_space<vmem>>, vector<32x1xf32>
    %7 = vector.broadcast %6 : vector<32x1xf32> to vector<32x256xf32>
    %8 = arith.addf %5, %7 : vector<32x256xf32>
    %cst_6 = arith.constant 0.000000e+00 : f32
    %9 = vector.broadcast %cst_6 : f32 to vector<32x256xf32>
    %10 = arith.maximumf %8, %9 : vector<32x256xf32>
    %11 = vector.extract_strided_slice %10 {offsets = [0, 0], sizes = [8, 256], strides = [1, 1]} : vector<32x256xf32> to vector<8x256xf32>
    %c0_7 = arith.constant 0 : index
    %c0_8 = arith.constant 0 : index
    %c0_9 = arith.constant 0 : index
    %12 = vector.load %arg7[%c0_7, %c0_8, %c0_9] : memref<1x32x256xf32, #tpu.memory_space<vmem>>, vector<1x8x256xf32>
    %13 = vector.shape_cast %12 : vector<1x8x256xf32> to vector<8x256xf32>
    %14 = vector.shape_cast %11 : vector<8x256xf32> to vector<1x8x256xf32>
    tpu.vector_store %arg7[%c0_7, %c0_8, %c0_9], %14 {strides = array<i32>} : memref<1x32x256xf32, #tpu.memory_space<vmem>>, vector<1x8x256xf32>,
    %15 = vector.extract_strided_slice %10 {offsets = [8, 0], sizes = [8, 256], strides = [1, 1]} : vector<32x256xf32> to vector<8x256xf32>
    %c17_i32 = arith.constant 17 : i32
    %16 = tpu.dynamic_rotate %15 by %c17_i32 dim 1 : vector<8x256xf32>, i32 -> vector<8x256xf32>
    %c0_10 = arith.constant 0 : index
    %c0_11 = arith.constant 0 : index
    %c0_12 = arith.constant 0 : index
    %17 = vector.load %arg6[%c0_10, %c0_11, %c0_12] : memref<27x8x256xf32, #tpu.memory_space<vmem>>, vector<1x8x256xf32>
    %18 = vector.shape_cast %17 : vector<1x8x256xf32> to vector<8x256xf32>
    %19 = arith.mulf %16, %18 : vector<8x256xf32>
    %c16_i32 = arith.constant 16 : i32
    %20 = tpu.dynamic_rotate %15 by %c16_i32 dim 1 : vector<8x256xf32>, i32 -> vector<8x256xf32>
    %c1 = arith.constant 1 : index
    %c0_13 = arith.constant 0 : index
    %c0_14 = arith.constant 0 : index
    %21 = vector.load %arg6[%c1, %c0_13, %c0_14] : memref<27x8x256xf32, #tpu.memory_space<vmem>>, vector<1x8x256xf32>
    %22 = vector.shape_cast %21 : vector<1x8x256xf32> to vector<8x256xf32>
    %23 = arith.mulf %20, %22 : vector<8x256xf32>
    %c15_i32 = arith.constant 15 : i32
    %24 = tpu.dynamic_rotate %15 by %c15_i32 dim 1 : vector<8x256xf32>, i32 -> vector<8x256xf32>
    %c2 = arith.constant 2 : index
    %c0_15 = arith.constant 0 : index
    %c0_16 = arith.constant 0 : index
    %25 = vector.load %arg6[%c2, %c0_15, %c0_16] : memref<27x8x256xf32, #tpu.memory_space<vmem>>, vector<1x8x256xf32>
    %26 = vector.shape_cast %25 : vector<1x8x256xf32> to vector<8x256xf32>
    %27 = arith.mulf %24, %26 : vector<8x256xf32>
    %c1_i32 = arith.constant 1 : i32
    %28 = tpu.dynamic_rotate %15 by %c1_i32 dim 1 : vector<8x256xf32>, i32 -> vector<8x256xf32>
    %c3 = arith.constant 3 : index
    %c0_17 = arith.constant 0 : index
    %c0_18 = arith.constant 0 : index
    %29 = vector.load %arg6[%c3, %c0_17, %c0_18] : memref<27x8x256xf32, #tpu.memory_space<vmem>>, vector<1x8x256xf32>
    %30 = vector.shape_cast %29 : vector<1x8x256xf32> to vector<8x256xf32>
    %31 = arith.mulf %28, %30 : vector<8x256xf32>
    %c4 = arith.constant 4 : index
    %c0_19 = arith.constant 0 : index
    %c0_20 = arith.constant 0 : index
    %32 = vector.load %arg6[%c4, %c0_19, %c0_20] : memref<27x8x256xf32, #tpu.memory_space<vmem>>, vector<1x8x256xf32>
    %33 = vector.shape_cast %32 : vector<1x8x256xf32> to vector<8x256xf32>
    %34 = arith.mulf %15, %33 : vector<8x256xf32>
    %c255_i32 = arith.constant 255 : i32
    %35 = tpu.dynamic_rotate %15 by %c255_i32 dim 1 : vector<8x256xf32>, i32 -> vector<8x256xf32>
    %c5 = arith.constant 5 : index
    %c0_21 = arith.constant 0 : index
    %c0_22 = arith.constant 0 : index
    %36 = vector.load %arg6[%c5, %c0_21, %c0_22] : memref<27x8x256xf32, #tpu.memory_space<vmem>>, vector<1x8x256xf32>
    %37 = vector.shape_cast %36 : vector<1x8x256xf32> to vector<8x256xf32>
    %38 = arith.mulf %35, %37 : vector<8x256xf32>
    %c241_i32 = arith.constant 241 : i32
    %39 = tpu.dynamic_rotate %15 by %c241_i32 dim 1 : vector<8x256xf32>, i32 -> vector<8x256xf32>
    %c6 = arith.constant 6 : index
    %c0_23 = arith.constant 0 : index
    %c0_24 = arith.constant 0 : index
    %40 = vector.load %arg6[%c6, %c0_23, %c0_24] : memref<27x8x256xf32, #tpu.memory_space<vmem>>, vector<1x8x256xf32>
    %41 = vector.shape_cast %40 : vector<1x8x256xf32> to vector<8x256xf32>
    %42 = arith.mulf %39, %41 : vector<8x256xf32>
    %c240_i32 = arith.constant 240 : i32
    %43 = tpu.dynamic_rotate %15 by %c240_i32 dim 1 : vector<8x256xf32>, i32 -> vector<8x256xf32>
    %c7 = arith.constant 7 : index
    %c0_25 = arith.constant 0 : index
    %c0_26 = arith.constant 0 : index
    %44 = vector.load %arg6[%c7, %c0_25, %c0_26] : memref<27x8x256xf32, #tpu.memory_space<vmem>>, vector<1x8x256xf32>
    %45 = vector.shape_cast %44 : vector<1x8x256xf32> to vector<8x256xf32>
    %46 = arith.mulf %43, %45 : vector<8x256xf32>
    %c239_i32 = arith.constant 239 : i32
    %47 = tpu.dynamic_rotate %15 by %c239_i32 dim 1 : vector<8x256xf32>, i32 -> vector<8x256xf32>
    %c8 = arith.constant 8 : index
    %c0_27 = arith.constant 0 : index
    %c0_28 = arith.constant 0 : index
    %48 = vector.load %arg6[%c8, %c0_27, %c0_28] : memref<27x8x256xf32, #tpu.memory_space<vmem>>, vector<1x8x256xf32>
    %49 = vector.shape_cast %48 : vector<1x8x256xf32> to vector<8x256xf32>
    %50 = arith.mulf %47, %49 : vector<8x256xf32>
    %51 = tpu.concatenate %19, %23, %27, %31, %34, %38, %42, %46, %50 in 0 : vector<8x256xf32>, vector<8x256xf32>, vector<8x256xf32>, vector<8x256xf32>, vector<8x256xf32>, vector<8x256xf32>, vector<8x256xf32>, vector<8x256xf32>, vector<8x256xf32> -> vector<72x256xf32>
    %52 = arith.truncf %51 : vector<72x256xf32> to vector<72x256xbf16>
    %c0_29 = arith.constant 0 : index
    %c0_30 = arith.constant 0 : index
    %c0_31 = arith.constant 0 : index
    %53 = vector.load %arg4[%c0_29, %c0_30, %c0_31] : memref<3x8x72xf32, #tpu.memory_space<vmem>>, vector<1x8x72xf32>
    %54 = vector.shape_cast %53 : vector<1x8x72xf32> to vector<8x72xf32>
    %55 = arith.truncf %54 : vector<8x72xf32> to vector<8x72xbf16>
    %cst_32 = arith.constant dense<0.000000e+00> : vector<8x256xf32>
    %56 = tpu.matmul %55, %52, %cst_32 {dimension_numbers = #tpu.dot_dimension_numbers<[1], [0], [0], [1], [0, 0, 1, 1], [], []>} : vector<8x72xbf16>, vector<72x256xbf16>, vector<8x256xf32> -> vector<8x256xf32>
    %c0_33 = arith.constant 0 : index
    %c0_34 = arith.constant 0 : index
    %c0_35 = arith.constant 0 : index
    %57 = vector.load %arg5[%c0_33, %c0_34, %c0_35] : memref<3x8x1xf32, #tpu.memory_space<vmem>>, vector<1x8x1xf32>
    %58 = vector.shape_cast %57 : vector<1x8x1xf32> to vector<8x1xf32>
    %59 = vector.broadcast %58 : vector<8x1xf32> to vector<8x256xf32>
    %60 = arith.addf %56, %59 : vector<8x256xf32>
    %cst_36 = arith.constant 0.000000e+00 : f32
    %61 = vector.broadcast %cst_36 : f32 to vector<8x256xf32>
    %62 = arith.maximumf %60, %61 : vector<8x256xf32>
    %c0_37 = arith.constant 0 : index
    %c8_38 = arith.constant 8 : index
    %c0_39 = arith.constant 0 : index
    %63 = vector.load %arg7[%c0_37, %c8_38, %c0_39] : memref<1x32x256xf32, #tpu.memory_space<vmem>>, vector<1x8x256xf32>
    %64 = vector.shape_cast %63 : vector<1x8x256xf32> to vector<8x256xf32>
    %65 = vector.shape_cast %62 : vector<8x256xf32> to vector<1x8x256xf32>
    tpu.vector_store %arg7[%c0_37, %c8_38, %c0_39], %65 {strides = array<i32>} : memref<1x32x256xf32, #tpu.memory_space<vmem>>, vector<1x8x256xf32>,
    %66 = vector.extract_strided_slice %10 {offsets = [16, 0], sizes = [8, 256], strides = [1, 1]} : vector<32x256xf32> to vector<8x256xf32>
    %c34_i32 = arith.constant 34 : i32
    %67 = tpu.dynamic_rotate %66 by %c34_i32 dim 1 : vector<8x256xf32>, i32 -> vector<8x256xf32>
    %c9 = arith.constant 9 : index
    %c0_40 = arith.constant 0 : index
    %c0_41 = arith.constant 0 : index
    %68 = vector.load %arg6[%c9, %c0_40, %c0_41] : memref<27x8x256xf32, #tpu.memory_space<vmem>>, vector<1x8x256xf32>
    %69 = vector.shape_cast %68 : vector<1x8x256xf32> to vector<8x256xf32>
    %70 = arith.mulf %67, %69 : vector<8x256xf32>
    %c32_i32 = arith.constant 32 : i32
    %71 = tpu.dynamic_rotate %66 by %c32_i32 dim 1 : vector<8x256xf32>, i32 -> vector<8x256xf32>
    %c10 = arith.constant 10 : index
    %c0_42 = arith.constant 0 : index
    %c0_43 = arith.constant 0 : index
    %72 = vector.load %arg6[%c10, %c0_42, %c0_43] : memref<27x8x256xf32, #tpu.memory_space<vmem>>, vector<1x8x256xf32>
    %73 = vector.shape_cast %72 : vector<1x8x256xf32> to vector<8x256xf32>
    %74 = arith.mulf %71, %73 : vector<8x256xf32>
    %c30_i32 = arith.constant 30 : i32
    %75 = tpu.dynamic_rotate %66 by %c30_i32 dim 1 : vector<8x256xf32>, i32 -> vector<8x256xf32>
    %c11 = arith.constant 11 : index
    %c0_44 = arith.constant 0 : index
    %c0_45 = arith.constant 0 : index
    %76 = vector.load %arg6[%c11, %c0_44, %c0_45] : memref<27x8x256xf32, #tpu.memory_space<vmem>>, vector<1x8x256xf32>
    %77 = vector.shape_cast %76 : vector<1x8x256xf32> to vector<8x256xf32>
    %78 = arith.mulf %75, %77 : vector<8x256xf32>
    %c2_i32 = arith.constant 2 : i32
    %79 = tpu.dynamic_rotate %66 by %c2_i32 dim 1 : vector<8x256xf32>, i32 -> vector<8x256xf32>
    %c12 = arith.constant 12 : index
    %c0_46 = arith.constant 0 : index
    %c0_47 = arith.constant 0 : index
    %80 = vector.load %arg6[%c12, %c0_46, %c0_47] : memref<27x8x256xf32, #tpu.memory_space<vmem>>, vector<1x8x256xf32>
    %81 = vector.shape_cast %80 : vector<1x8x256xf32> to vector<8x256xf32>
    %82 = arith.mulf %79, %81 : vector<8x256xf32>
    %c13 = arith.constant 13 : index
    %c0_48 = arith.constant 0 : index
    %c0_49 = arith.constant 0 : index
    %83 = vector.load %arg6[%c13, %c0_48, %c0_49] : memref<27x8x256xf32, #tpu.memory_space<vmem>>, vector<1x8x256xf32>
    %84 = vector.shape_cast %83 : vector<1x8x256xf32> to vector<8x256xf32>
    %85 = arith.mulf %66, %84 : vector<8x256xf32>
    %c254_i32 = arith.constant 254 : i32
    %86 = tpu.dynamic_rotate %66 by %c254_i32 dim 1 : vector<8x256xf32>, i32 -> vector<8x256xf32>
    %c14 = arith.constant 14 : index
    %c0_50 = arith.constant 0 : index
    %c0_51 = arith.constant 0 : index
    %87 = vector.load %arg6[%c14, %c0_50, %c0_51] : memref<27x8x256xf32, #tpu.memory_space<vmem>>, vector<1x8x256xf32>
    %88 = vector.shape_cast %87 : vector<1x8x256xf32> to vector<8x256xf32>
    %89 = arith.mulf %86, %88 : vector<8x256xf32>
    %c226_i32 = arith.constant 226 : i32
    %90 = tpu.dynamic_rotate %66 by %c226_i32 dim 1 : vector<8x256xf32>, i32 -> vector<8x256xf32>
    %c15 = arith.constant 15 : index
    %c0_52 = arith.constant 0 : index
    %c0_53 = arith.constant 0 : index
    %91 = vector.load %arg6[%c15, %c0_52, %c0_53] : memref<27x8x256xf32, #tpu.memory_space<vmem>>, vector<1x8x256xf32>
    %92 = vector.shape_cast %91 : vector<1x8x256xf32> to vector<8x256xf32>
    %93 = arith.mulf %90, %92 : vector<8x256xf32>
    %c224_i32 = arith.constant 224 : i32
    %94 = tpu.dynamic_rotate %66 by %c224_i32 dim 1 : vector<8x256xf32>, i32 -> vector<8x256xf32>
    %c16 = arith.constant 16 : index
    %c0_54 = arith.constant 0 : index
    %c0_55 = arith.constant 0 : index
    %95 = vector.load %arg6[%c16, %c0_54, %c0_55] : memref<27x8x256xf32, #tpu.memory_space<vmem>>, vector<1x8x256xf32>
    %96 = vector.shape_cast %95 : vector<1x8x256xf32> to vector<8x256xf32>
    %97 = arith.mulf %94, %96 : vector<8x256xf32>
    %c222_i32 = arith.constant 222 : i32
    %98 = tpu.dynamic_rotate %66 by %c222_i32 dim 1 : vector<8x256xf32>, i32 -> vector<8x256xf32>
    %c17 = arith.constant 17 : index
    %c0_56 = arith.constant 0 : index
    %c0_57 = arith.constant 0 : index
    %99 = vector.load %arg6[%c17, %c0_56, %c0_57] : memref<27x8x256xf32, #tpu.memory_space<vmem>>, vector<1x8x256xf32>
    %100 = vector.shape_cast %99 : vector<1x8x256xf32> to vector<8x256xf32>
    %101 = arith.mulf %98, %100 : vector<8x256xf32>
    %102 = tpu.concatenate %70, %74, %78, %82, %85, %89, %93, %97, %101 in 0 : vector<8x256xf32>, vector<8x256xf32>, vector<8x256xf32>, vector<8x256xf32>, vector<8x256xf32>, vector<8x256xf32>, vector<8x256xf32>, vector<8x256xf32>, vector<8x256xf32> -> vector<72x256xf32>
    %103 = arith.truncf %102 : vector<72x256xf32> to vector<72x256xbf16>
    %c1_58 = arith.constant 1 : index
    %c0_59 = arith.constant 0 : index
    %c0_60 = arith.constant 0 : index
    %104 = vector.load %arg4[%c1_58, %c0_59, %c0_60] : memref<3x8x72xf32, #tpu.memory_space<vmem>>, vector<1x8x72xf32>
    %105 = vector.shape_cast %104 : vector<1x8x72xf32> to vector<8x72xf32>
    %106 = arith.truncf %105 : vector<8x72xf32> to vector<8x72xbf16>
    %cst_61 = arith.constant dense<0.000000e+00> : vector<8x256xf32>
    %107 = tpu.matmul %106, %103, %cst_61 {dimension_numbers = #tpu.dot_dimension_numbers<[1], [0], [0], [1], [0, 0, 1, 1], [], []>} : vector<8x72xbf16>, vector<72x256xbf16>, vector<8x256xf32> -> vector<8x256xf32>
    %c1_62 = arith.constant 1 : index
    %c0_63 = arith.constant 0 : index
    %c0_64 = arith.constant 0 : index
    %108 = vector.load %arg5[%c1_62, %c0_63, %c0_64] : memref<3x8x1xf32, #tpu.memory_space<vmem>>, vector<1x8x1xf32>
    %109 = vector.shape_cast %108 : vector<1x8x1xf32> to vector<8x1xf32>
    %110 = vector.broadcast %109 : vector<8x1xf32> to vector<8x256xf32>
    %111 = arith.addf %107, %110 : vector<8x256xf32>
    %cst_65 = arith.constant 0.000000e+00 : f32
    %112 = vector.broadcast %cst_65 : f32 to vector<8x256xf32>
    %113 = arith.maximumf %111, %112 : vector<8x256xf32>
    %c0_66 = arith.constant 0 : index
    %c16_67 = arith.constant 16 : index
    %c0_68 = arith.constant 0 : index
    %114 = vector.load %arg7[%c0_66, %c16_67, %c0_68] : memref<1x32x256xf32, #tpu.memory_space<vmem>>, vector<1x8x256xf32>
    %115 = vector.shape_cast %114 : vector<1x8x256xf32> to vector<8x256xf32>
    %116 = vector.shape_cast %113 : vector<8x256xf32> to vector<1x8x256xf32>
    tpu.vector_store %arg7[%c0_66, %c16_67, %c0_68], %116 {strides = array<i32>} : memref<1x32x256xf32, #tpu.memory_space<vmem>>, vector<1x8x256xf32>,
    %117 = vector.extract_strided_slice %10 {offsets = [24, 0], sizes = [8, 256], strides = [1, 1]} : vector<32x256xf32> to vector<8x256xf32>
    %c68_i32 = arith.constant 68 : i32
    %118 = tpu.dynamic_rotate %117 by %c68_i32 dim 1 : vector<8x256xf32>, i32 -> vector<8x256xf32>
    %c18 = arith.constant 18 : index
    %c0_69 = arith.constant 0 : index
    %c0_70 = arith.constant 0 : index
    %119 = vector.load %arg6[%c18, %c0_69, %c0_70] : memref<27x8x256xf32, #tpu.memory_space<vmem>>, vector<1x8x256xf32>
    %120 = vector.shape_cast %119 : vector<1x8x256xf32> to vector<8x256xf32>
    %121 = arith.mulf %118, %120 : vector<8x256xf32>
    %c64_i32 = arith.constant 64 : i32
    %122 = tpu.dynamic_rotate %117 by %c64_i32 dim 1 : vector<8x256xf32>, i32 -> vector<8x256xf32>
    %c19 = arith.constant 19 : index
    %c0_71 = arith.constant 0 : index
    %c0_72 = arith.constant 0 : index
    %123 = vector.load %arg6[%c19, %c0_71, %c0_72] : memref<27x8x256xf32, #tpu.memory_space<vmem>>, vector<1x8x256xf32>
    %124 = vector.shape_cast %123 : vector<1x8x256xf32> to vector<8x256xf32>
    %125 = arith.mulf %122, %124 : vector<8x256xf32>
    %c60_i32 = arith.constant 60 : i32
    %126 = tpu.dynamic_rotate %117 by %c60_i32 dim 1 : vector<8x256xf32>, i32 -> vector<8x256xf32>
    %c20 = arith.constant 20 : index
    %c0_73 = arith.constant 0 : index
    %c0_74 = arith.constant 0 : index
    %127 = vector.load %arg6[%c20, %c0_73, %c0_74] : memref<27x8x256xf32, #tpu.memory_space<vmem>>, vector<1x8x256xf32>
    %128 = vector.shape_cast %127 : vector<1x8x256xf32> to vector<8x256xf32>
    %129 = arith.mulf %126, %128 : vector<8x256xf32>
    %c4_i32 = arith.constant 4 : i32
    %130 = tpu.dynamic_rotate %117 by %c4_i32 dim 1 : vector<8x256xf32>, i32 -> vector<8x256xf32>
    %c21 = arith.constant 21 : index
    %c0_75 = arith.constant 0 : index
    %c0_76 = arith.constant 0 : index
    %131 = vector.load %arg6[%c21, %c0_75, %c0_76] : memref<27x8x256xf32, #tpu.memory_space<vmem>>, vector<1x8x256xf32>
    %132 = vector.shape_cast %131 : vector<1x8x256xf32> to vector<8x256xf32>
    %133 = arith.mulf %130, %132 : vector<8x256xf32>
    %c22 = arith.constant 22 : index
    %c0_77 = arith.constant 0 : index
    %c0_78 = arith.constant 0 : index
    %134 = vector.load %arg6[%c22, %c0_77, %c0_78] : memref<27x8x256xf32, #tpu.memory_space<vmem>>, vector<1x8x256xf32>
    %135 = vector.shape_cast %134 : vector<1x8x256xf32> to vector<8x256xf32>
    %136 = arith.mulf %117, %135 : vector<8x256xf32>
    %c252_i32 = arith.constant 252 : i32
    %137 = tpu.dynamic_rotate %117 by %c252_i32 dim 1 : vector<8x256xf32>, i32 -> vector<8x256xf32>
    %c23 = arith.constant 23 : index
    %c0_79 = arith.constant 0 : index
    %c0_80 = arith.constant 0 : index
    %138 = vector.load %arg6[%c23, %c0_79, %c0_80] : memref<27x8x256xf32, #tpu.memory_space<vmem>>, vector<1x8x256xf32>
    %139 = vector.shape_cast %138 : vector<1x8x256xf32> to vector<8x256xf32>
    %140 = arith.mulf %137, %139 : vector<8x256xf32>
    %c196_i32 = arith.constant 196 : i32
    %141 = tpu.dynamic_rotate %117 by %c196_i32 dim 1 : vector<8x256xf32>, i32 -> vector<8x256xf32>
    %c24 = arith.constant 24 : index
    %c0_81 = arith.constant 0 : index
    %c0_82 = arith.constant 0 : index
    %142 = vector.load %arg6[%c24, %c0_81, %c0_82] : memref<27x8x256xf32, #tpu.memory_space<vmem>>, vector<1x8x256xf32>
    %143 = vector.shape_cast %142 : vector<1x8x256xf32> to vector<8x256xf32>
    %144 = arith.mulf %141, %143 : vector<8x256xf32>
    %c192_i32 = arith.constant 192 : i32
    %145 = tpu.dynamic_rotate %117 by %c192_i32 dim 1 : vector<8x256xf32>, i32 -> vector<8x256xf32>
    %c25 = arith.constant 25 : index
    %c0_83 = arith.constant 0 : index
    %c0_84 = arith.constant 0 : index
    %146 = vector.load %arg6[%c25, %c0_83, %c0_84] : memref<27x8x256xf32, #tpu.memory_space<vmem>>, vector<1x8x256xf32>
    %147 = vector.shape_cast %146 : vector<1x8x256xf32> to vector<8x256xf32>
    %148 = arith.mulf %145, %147 : vector<8x256xf32>
    %c188_i32 = arith.constant 188 : i32
    %149 = tpu.dynamic_rotate %117 by %c188_i32 dim 1 : vector<8x256xf32>, i32 -> vector<8x256xf32>
    %c26 = arith.constant 26 : index
    %c0_85 = arith.constant 0 : index
    %c0_86 = arith.constant 0 : index
    %150 = vector.load %arg6[%c26, %c0_85, %c0_86] : memref<27x8x256xf32, #tpu.memory_space<vmem>>, vector<1x8x256xf32>
    %151 = vector.shape_cast %150 : vector<1x8x256xf32> to vector<8x256xf32>
    %152 = arith.mulf %149, %151 : vector<8x256xf32>
    %153 = tpu.concatenate %121, %125, %129, %133, %136, %140, %144, %148, %152 in 0 : vector<8x256xf32>, vector<8x256xf32>, vector<8x256xf32>, vector<8x256xf32>, vector<8x256xf32>, vector<8x256xf32>, vector<8x256xf32>, vector<8x256xf32>, vector<8x256xf32> -> vector<72x256xf32>
    %154 = arith.truncf %153 : vector<72x256xf32> to vector<72x256xbf16>
    %c2_87 = arith.constant 2 : index
    %c0_88 = arith.constant 0 : index
    %c0_89 = arith.constant 0 : index
    %155 = vector.load %arg4[%c2_87, %c0_88, %c0_89] : memref<3x8x72xf32, #tpu.memory_space<vmem>>, vector<1x8x72xf32>
    %156 = vector.shape_cast %155 : vector<1x8x72xf32> to vector<8x72xf32>
    %157 = arith.truncf %156 : vector<8x72xf32> to vector<8x72xbf16>
    %cst_90 = arith.constant dense<0.000000e+00> : vector<8x256xf32>
    %158 = tpu.matmul %157, %154, %cst_90 {dimension_numbers = #tpu.dot_dimension_numbers<[1], [0], [0], [1], [0, 0, 1, 1], [], []>} : vector<8x72xbf16>, vector<72x256xbf16>, vector<8x256xf32> -> vector<8x256xf32>
    %c2_91 = arith.constant 2 : index
    %c0_92 = arith.constant 0 : index
    %c0_93 = arith.constant 0 : index
    %159 = vector.load %arg5[%c2_91, %c0_92, %c0_93] : memref<3x8x1xf32, #tpu.memory_space<vmem>>, vector<1x8x1xf32>
    %160 = vector.shape_cast %159 : vector<1x8x1xf32> to vector<8x1xf32>
    %161 = vector.broadcast %160 : vector<8x1xf32> to vector<8x256xf32>
    %162 = arith.addf %158, %161 : vector<8x256xf32>
    %cst_94 = arith.constant 0.000000e+00 : f32
    %163 = vector.broadcast %cst_94 : f32 to vector<8x256xf32>
    %164 = arith.maximumf %162, %163 : vector<8x256xf32>
    %c0_95 = arith.constant 0 : index
    %c24_96 = arith.constant 24 : index
    %c0_97 = arith.constant 0 : index
    %165 = vector.load %arg7[%c0_95, %c24_96, %c0_97] : memref<1x32x256xf32, #tpu.memory_space<vmem>>, vector<1x8x256xf32>
    %166 = vector.shape_cast %165 : vector<1x8x256xf32> to vector<8x256xf32>
    %167 = vector.shape_cast %164 : vector<8x256xf32> to vector<1x8x256xf32>
    tpu.vector_store %arg7[%c0_95, %c24_96, %c0_97], %167 {strides = array<i32>} : memref<1x32x256xf32, #tpu.memory_space<vmem>>, vector<1x8x256xf32>,
    return
  }
  func.func @transform_0(%arg0: i32) -> (i32, i32, i32) {
    %c0_i32 = arith.constant 0 : i32
    %c0_i32_0 = arith.constant 0 : i32
    %c0_i32_1 = arith.constant 0 : i32
    return %arg0, %c0_i32, %c0_i32_0 : i32, i32, i32
  }
  func.func @transform_1(%arg0: i32) -> (i32, i32) {
    %c0_i32 = arith.constant 0 : i32
    %c0_i32_0 = arith.constant 0 : i32
    %c0_i32_1 = arith.constant 0 : i32
    return %c0_i32, %c0_i32_0 : i32, i32
  }
  func.func @transform_2(%arg0: i32) -> (i32, i32) {
    %c0_i32 = arith.constant 0 : i32
    %c0_i32_0 = arith.constant 0 : i32
    %c0_i32_1 = arith.constant 0 : i32
    return %c0_i32, %c0_i32_0 : i32, i32
  }
  func.func @transform_3(%arg0: i32) -> (i32, i32, i32) {
    %c0_i32 = arith.constant 0 : i32
    %c0_i32_0 = arith.constant 0 : i32
    %c0_i32_1 = arith.constant 0 : i32
    %c0_i32_2 = arith.constant 0 : i32
    return %c0_i32, %c0_i32_0, %c0_i32_1 : i32, i32, i32
  }
  func.func @transform_4(%arg0: i32) -> (i32, i32, i32) {
    %c0_i32 = arith.constant 0 : i32
    %c0_i32_0 = arith.constant 0 : i32
    %c0_i32_1 = arith.constant 0 : i32
    %c0_i32_2 = arith.constant 0 : i32
    return %c0_i32, %c0_i32_0, %c0_i32_1 : i32, i32, i32
  }
  func.func @transform_5(%arg0: i32) -> (i32, i32, i32) {
    %c0_i32 = arith.constant 0 : i32
    %c0_i32_0 = arith.constant 0 : i32
    %c0_i32_1 = arith.constant 0 : i32
    %c0_i32_2 = arith.constant 0 : i32
    return %c0_i32, %c0_i32_0, %c0_i32_1 : i32, i32, i32
  }
  func.func @transform_6(%arg0: i32) -> (i32, i32, i32) {
    %c0_i32 = arith.constant 0 : i32
    %c0_i32_0 = arith.constant 0 : i32
    %c0_i32_1 = arith.constant 0 : i32
    return %arg0, %c0_i32, %c0_i32_0 : i32, i32, i32
  }
}

</mosaic_0001>

<llo_original>
// kernel: feature_pyramid_pallas.1
$region0: #{feature_pyramid_pallas.1}
  #allocation0 [shape = 'u32[]', space=smem, size = 0x4, offset = 0x4, fixed_abs, tag = 'smem constant byte address 0x4 - core index']
  #allocation1 [shape = 'u32[144,128]{1,0:T(1,128)}', space=vmem, size = 0x12000, scoped, tag = 'internal scratch']
  %s0 = inlined_call_operand.vmem [shape: f32[2,8,256], index: 0, kind: input, shape index: {}]
  %s1 = inlined_call_operand.vmem [shape: f32[32,8], index: 1, kind: input, shape index: {}]
  %s2 = inlined_call_operand.vmem [shape: f32[32,1], index: 2, kind: input, shape index: {}]
  %s3 = inlined_call_operand.vmem [shape: f32[3,8,72], index: 3, kind: input, shape index: {}]
  %s4 = inlined_call_operand.vmem [shape: f32[3,8,1], index: 4, kind: input, shape index: {}]
  %s5 = inlined_call_operand.vmem [shape: f32[27,8,256], index: 5, kind: input, shape index: {}]
  %s6 = inlined_call_operand.vmem [shape: f32[2,32,256], index: 6, kind: output, shape index: {}]
  %s7 = sld [smem:[#allocation0]]
  $region57: #{feature_pyramid_pallas.1} parent=0
    _
  %s9 = ssub.s32 1, %s7
  %s10 = scalar_select 0, %s9, %s7
  loop: start=0, step=1, limit=4
  $region2: #{feature_pyramid_pallas.1} parent=0 // loop_pre_header
    _
  $region3: #{feature_pyramid_pallas.1} parent=0 // loop_header
    %s12 = sphi 0, %s16
    %p13 = scmp.ge.s32.totalorder %s12, 4
    %s22 = sphi 0, %s24
    %s25 = sphi 0, %s22
    %s26 = sphi 0, %s25
    %s42 = sphi 0, %s26
    %s46 = sphi 0, %s46
    %s48 = sphi 0, %s46
    %s49 = sphi 0, %s48
    %s63 = sphi 0, %s49
    %s67 = sphi 0, %s67
    %s69 = sphi 0, %s67
    %s70 = sphi 0, %s69
    %s84 = sphi 0, %s70
    %s88 = sphi 0, %s88
    %s90 = sphi 0, %s88
    %s91 = sphi 0, %s90
    %s105 = sphi 0, %s91
    %s109 = sphi 0, %s109
    %s111 = sphi 0, %s109
    %s112 = sphi 0, %s111
    %s126 = sphi 0, %s112
    %s130 = sphi 0, %s130
    %s132 = sphi 0, %s130
    %s133 = sphi 0, %s132
    %s147 = sphi 0, %s133
    %s153 = sphi 0, %s155
    %s156 = sphi 0, %s153
    %s157 = sphi 0, %s156
    %s173 = sphi 0, %s157
  $region4: #{feature_pyramid_pallas.1} parent=0 // loop_header_branch
    %15 = sbr.rel (%p13) target = $region8
  $region5: #{feature_pyramid_pallas.1} parent=0 // loop_body
    %s17 = ssub.s32 %s12, 1
    %s18 = ssub.s32 %s12, 2
    %s19 = sadd.s32 %s12, 1
    %s20 = ssub.s32 %s12, %s19
    %p21 = scmp.eq.s32.totalorder %s20, 0
    %s23 = sadd.s32 %s22, 1
    %s24 = scalar_select %p21, %s22, %s23
    %p27 = pneg %p21
    %p28 = scmp.eq.s32.totalorder %s12, 1
    %p29 = por %p27, %p28
    %p30 = scmp.ne.s32.totalorder %s22, %s25
    %p31 = scmp.eq.s32.totalorder %s12, 0
    %p32 = por %p30, %p31
    %p33 = scmp.ne.s32.totalorder %s22, %s25
    %p34 = scmp.eq.s32.totalorder %s17, 1
    %p35 = por %p33, %p34
    %p36 = scmp.ne.s32.totalorder %s25, %s26
    %p37 = scmp.eq.s32.totalorder %s17, 0
    %p38 = por %p36, %p37
    %p39 = scmp.ne.s32.totalorder %s25, %s26
    %p40 = scmp.eq.s32.totalorder %s18, 1
    %p41 = por %p39, %p40
    %p43 = scmp.ne.s32.totalorder %s26, %s42
    %p44 = scmp.eq.s32.totalorder %s18, 0
    %p45 = por %p43, %p44
    %s47 = sadd.s32 %s46, 1
    %p50 = scmp.eq.s32.totalorder %s12, 1
    %p51 = scmp.ne.s32.totalorder %s46, %s48
    %p52 = scmp.eq.s32.totalorder %s12, 0
    %p53 = por %p51, %p52
    %p54 = scmp.ne.s32.totalorder %s46, %s48
    %p55 = scmp.eq.s32.totalorder %s17, 1
    %p56 = por %p54, %p55
    %p57 = scmp.ne.s32.totalorder %s48, %s49
    %p58 = scmp.eq.s32.totalorder %s17, 0
    %p59 = por %p57, %p58
    %p60 = scmp.ne.s32.totalorder %s48, %s49
    %p61 = scmp.eq.s32.totalorder %s18, 1
    %p62 = por %p60, %p61
    %p64 = scmp.ne.s32.totalorder %s49, %s63
    %p65 = scmp.eq.s32.totalorder %s18, 0
    %p66 = por %p64, %p65
    %s68 = sadd.s32 %s67, 1
    %p71 = scmp.eq.s32.totalorder %s12, 1
    %p72 = scmp.ne.s32.totalorder %s67, %s69
    %p73 = scmp.eq.s32.totalorder %s12, 0
    %p74 = por %p72, %p73
    %p75 = scmp.ne.s32.totalorder %s67, %s69
    %p76 = scmp.eq.s32.totalorder %s17, 1
    %p77 = por %p75, %p76
    %p78 = scmp.ne.s32.totalorder %s69, %s70
    %p79 = scmp.eq.s32.totalorder %s17, 0
    %p80 = por %p78, %p79
    %p81 = scmp.ne.s32.totalorder %s69, %s70
    %p82 = scmp.eq.s32.totalorder %s18, 1
    %p83 = por %p81, %p82
    %p85 = scmp.ne.s32.totalorder %s70, %s84
    %p86 = scmp.eq.s32.totalorder %s18, 0
    %p87 = por %p85, %p86
    %s89 = sadd.s32 %s88, 1
    %p92 = scmp.eq.s32.totalorder %s12, 1
    %p93 = scmp.ne.s32.totalorder %s88, %s90
    %p94 = scmp.eq.s32.totalorder %s12, 0
    %p95 = por %p93, %p94
    %p96 = scmp.ne.s32.totalorder %s88, %s90
    %p97 = scmp.eq.s32.totalorder %s17, 1
    %p98 = por %p96, %p97
    %p99 = scmp.ne.s32.totalorder %s90, %s91
    %p100 = scmp.eq.s32.totalorder %s17, 0
    %p101 = por %p99, %p100
    %p102 = scmp.ne.s32.totalorder %s90, %s91
    %p103 = scmp.eq.s32.totalorder %s18, 1
    %p104 = por %p102, %p103
    %p106 = scmp.ne.s32.totalorder %s91, %s105
    %p107 = scmp.eq.s32.totalorder %s18, 0
    %p108 = por %p106, %p107
    %s110 = sadd.s32 %s109, 1
    %p113 = scmp.eq.s32.totalorder %s12, 1
    %p114 = scmp.ne.s32.totalorder %s109, %s111
    %p115 = scmp.eq.s32.totalorder %s12, 0
    %p116 = por %p114, %p115
    %p117 = scmp.ne.s32.totalorder %s109, %s111
    %p118 = scmp.eq.s32.totalorder %s17, 1
    %p119 = por %p117, %p118
    %p120 = scmp.ne.s32.totalorder %s111, %s112
    %p121 = scmp.eq.s32.totalorder %s17, 0
    %p122 = por %p120, %p121
    %p123 = scmp.ne.s32.totalorder %s111, %s112
    %p124 = scmp.eq.s32.totalorder %s18, 1
    %p125 = por %p123, %p124
    %p127 = scmp.ne.s32.totalorder %s112, %s126
    %p128 = scmp.eq.s32.totalorder %s18, 0
    %p129 = por %p127, %p128
    %s131 = sadd.s32 %s130, 1
    %p134 = scmp.eq.s32.totalorder %s12, 1
    %p135 = scmp.ne.s32.totalorder %s130, %s132
    %p136 = scmp.eq.s32.totalorder %s12, 0
    %p137 = por %p135, %p136
    %p138 = scmp.ne.s32.totalorder %s130, %s132
    %p139 = scmp.eq.s32.totalorder %s17, 1
    %p140 = por %p138, %p139
    %p141 = scmp.ne.s32.totalorder %s132, %s133
    %p142 = scmp.eq.s32.totalorder %s17, 0
    %p143 = por %p141, %p142
    %p144 = scmp.ne.s32.totalorder %s132, %s133
    %p145 = scmp.eq.s32.totalorder %s18, 1
    %p146 = por %p144, %p145
    %p148 = scmp.ne.s32.totalorder %s133, %s147
    %p149 = scmp.eq.s32.totalorder %s18, 0
    %p150 = por %p148, %p149
    %s151 = ssub.s32 %s12, %s19
    %p152 = scmp.eq.s32.totalorder %s151, 0
    %s154 = sadd.s32 %s153, 1
    %s155 = scalar_select %p152, %s153, %s154
    %p158 = pneg %p152
    %p159 = scmp.eq.s32.totalorder %s12, 1
    %p160 = por %p158, %p159
    %p161 = scmp.ne.s32.totalorder %s153, %s156
    %p162 = scmp.eq.s32.totalorder %s12, 0
    %p163 = por %p161, %p162
    %p164 = scmp.ne.s32.totalorder %s153, %s156
    %p165 = scmp.eq.s32.totalorder %s17, 1
    %p166 = por %p164, %p165
    %p167 = scmp.ne.s32.totalorder %s156, %s157
    %p168 = scmp.eq.s32.totalorder %s17, 0
    %p169 = por %p167, %p168
    %p170 = scmp.ne.s32.totalorder %s156, %s157
    %p171 = scmp.eq.s32.totalorder %s18, 1
    %p172 = por %p170, %p171
    %p174 = scmp.ne.s32.totalorder %s157, %s173
    %p175 = scmp.eq.s32.totalorder %s18, 0
    %p176 = por %p174, %p175
    %p177 = scmp.le.s32.totalorder 1, %s12
    %p178 = scmp.lt.s32.totalorder %s12, 3
    %p179 = pnand %p177, %p178
    %p180 = pneg %p179
    // Predicated region
    $region9: #{feature_pyramid_pallas.1} parent=5 // pred_check
      _
    $region10: #{feature_pyramid_pallas.1} parent=5 // pred_check_branch
      %182 = sbr.rel (%p179) target = $region12
    $region11: #{feature_pyramid_pallas.1} parent=5 // pred_region
      %s183 = ssub.s32 %s12, 1
      // Predicated region
      $region13: #{feature_pyramid_pallas.1} parent=11 // pred_check
        %p184 = pneg %p59
      $region14: #{feature_pyramid_pallas.1} parent=11 // pred_check_branch
        %186 = sbr.rel (%p184) target = $region16
      $region15: #{feature_pyramid_pallas.1} parent=11 // pred_region
        _
      $region16: #{feature_pyramid_pallas.1} parent=11 // pred_fallthru
        _
      // Predicated region
      $region17: #{feature_pyramid_pallas.1} parent=11 // pred_check
        %p187 = pneg %p80
      $region18: #{feature_pyramid_pallas.1} parent=11 // pred_check_branch
        %189 = sbr.rel (%p187) target = $region20
      $region19: #{feature_pyramid_pallas.1} parent=11 // pred_region
        _
      $region20: #{feature_pyramid_pallas.1} parent=11 // pred_fallthru
        _
      // Predicated region
      $region21: #{feature_pyramid_pallas.1} parent=11 // pred_check
        %p190 = pneg %p101
      $region22: #{feature_pyramid_pallas.1} parent=11 // pred_check_branch
        %192 = sbr.rel (%p190) target = $region24
      $region23: #{feature_pyramid_pallas.1} parent=11 // pred_region
        _
      $region24: #{feature_pyramid_pallas.1} parent=11 // pred_fallthru
        _
      // Predicated region
      $region25: #{feature_pyramid_pallas.1} parent=11 // pred_check
        %p193 = pneg %p122
      $region26: #{feature_pyramid_pallas.1} parent=11 // pred_check_branch
        %195 = sbr.rel (%p193) target = $region28
      $region27: #{feature_pyramid_pallas.1} parent=11 // pred_region
        _
      $region28: #{feature_pyramid_pallas.1} parent=11 // pred_fallthru
        _
      // Predicated region
      $region29: #{feature_pyramid_pallas.1} parent=11 // pred_check
        %p196 = pneg %p143
      $region30: #{feature_pyramid_pallas.1} parent=11 // pred_check_branch
        %198 = sbr.rel (%p196) target = $region32
      $region31: #{feature_pyramid_pallas.1} parent=11 // pred_region
        _
      $region32: #{feature_pyramid_pallas.1} parent=11 // pred_fallthru
        _
    $region12: #{feature_pyramid_pallas.1} parent=5 // pred_fallthru
      _
    %p199 = scmp.lt.s32.totalorder %s12, 2
    // Predicated region
    $region33: #{feature_pyramid_pallas.1} parent=5 // pred_check
      %p200 = pneg %p199
    $region34: #{feature_pyramid_pallas.1} parent=5 // pred_check_branch
      %202 = sbr.rel (%p200) target = $region36
    $region35: #{feature_pyramid_pallas.1} parent=5 // pred_region
      // Predicated region
      $region37: #{feature_pyramid_pallas.1} parent=35 // pred_check
        %p203 = pneg %p32
      $region38: #{feature_pyramid_pallas.1} parent=35 // pred_check_branch
        %205 = sbr.rel (%p203) target = $region40
      $region39: #{feature_pyramid_pallas.1} parent=35 // pred_region
        %p206 = scmp.lt.s32.totalorder %s12, 1
        %s207 = scalar_select %p206, %s12, 1
        %s208 = smul.addr %s207, 2
        %s209 = smul.addr %s208, 8
        %s210 = scalar_lea.vmem %s0, %s209
      $region40: #{feature_pyramid_pallas.1} parent=35 // pred_fallthru
        _
    $region36: #{feature_pyramid_pallas.1} parent=5 // pred_fallthru
      _
    %p211 = scmp.le.s32.totalorder 1, %s12
    %p212 = scmp.lt.s32.totalorder %s12, 3
    %p213 = pnand %p211, %p212
    %p214 = pneg %p213
    // Predicated region
    $region41: #{feature_pyramid_pallas.1} parent=5 // pred_check
      _
    $region42: #{feature_pyramid_pallas.1} parent=5 // pred_check_branch
      %216 = sbr.rel (%p213) target = $region44
    $region43: #{feature_pyramid_pallas.1} parent=5 // pred_region
      %s217 = ssub.s32 %s12, 1
      %p218 = scmp.lt.s32.totalorder %s17, 1
      %s219 = scalar_select %p218, %s17, 1
      %s220 = smul.addr %s219, 2
      %s221 = smul.addr %s220, 8
      %s222 = scalar_lea.vmem %s0, %s221
      %p223 = pneg %p38
      %p224 = pneg %p35
      %p225 = pneg %p59
      %p226 = pneg %p56
      %p227 = pneg %p80
      %p228 = pneg %p77
      %p229 = pneg %p101
      %p230 = pneg %p98
      %p231 = pneg %p122
      %p232 = pneg %p119
      %p233 = pneg %p143
      %p234 = pneg %p140
      %p235 = pneg %p169
      %p236 = pneg %p166
      %p237 = scmp.lt.s32.totalorder %s17, 1
      %s238 = scalar_select %p237, %s17, 1
      %s239 = smul.addr %s238, 8
      %s240 = smul.addr %s239, 8
      %s241 = scalar_lea.vmem %s6, %s240
      %p242 = scmp.lt.s32.totalorder %s17, 1
      %s243 = scalar_select %p242, %s17, 1
      %s244 = smul.addr %s243, 2
      %s245 = smul.addr %s244, 8
      %s246 = scalar_lea.vmem %s0, %s245
      %p247 = scmp.lt.s32.totalorder %s17, 1
      %s248 = scalar_select %p247, %s17, 1
      %s249 = smul.addr %s248, 8
      %s250 = smul.addr %s249, 8
      %s251 = scalar_lea.vmem %s6, %s250
      %v253 = vld [vmem:[%s246] sm:$0xff]
      %v254 = vld [vmem:[%s246 + $0x8] sm:$0xff]
      %v255 = vpack.c.bf16 %v253, %v253
      %v256 = vpack.c.bf16 %v254, %v254
      %v257 = vld [vmem:[%s1] sm:$0xff]
      %v258 = vld [vmem:[%s1 + $0x8] sm:$0xff]
      %v259 = vld [vmem:[%s1 + $0x10] sm:$0xff]
      %v260 = vld [vmem:[%s1 + $0x18] sm:$0xff]
      %v261 = vpack.c.bf16 %v258, %v257
      %v262 = vpack.c.bf16 %v260, %v259
      %v263 = vld [vmem:[%s2] sm:$0xff]
      %v264 = vld [vmem:[%s2 + $0x8] sm:$0xff]
      %v265 = vld [vmem:[%s2 + $0x10] sm:$0xff]
      %v266 = vld [vmem:[%s2 + $0x18] sm:$0xff]
      %268 = vset.pattern.permute.xlu0 0
      %269 = vperm.xlu0 %268, %v263
      %v270 = vpop.permute.xlu0 %269
      %273 = vset.pattern.permute.xlu0 0
      %274 = vperm.xlu0 %273, %v264
      %v275 = vpop.permute.xlu0 %274
      %278 = vset.pattern.permute.xlu0 0
      %279 = vperm.xlu0 %278, %v265
      %v280 = vpop.permute.xlu0 %279
      %283 = vset.pattern.permute.xlu0 0
      %284 = vperm.xlu0 %283, %v266
      %v285 = vpop.permute.xlu0 %284
      %vm287 = vcmask 64512
      %v289 = vsel %vm287, %v261, 0
      %v292 = vsel %vm287, %v262, 0
      %vm294 = vcmask 1043456
      %v296 = vsel %vm294, %v255, 0
      %v299 = vsel %vm294, %v256, 0
      %301 = vmatprep.subr.bf16.mxu0 %v299
      %302 = vmatpush1.bf16.msra.mxu0 %v296
      %303 = vmatprep.subr.bf16.mxu0 0
      %304 = vmatpush1.bf16.msra.mxu0 0
      %305 = vmatprep.subr.bf16.mxu0 0
      %306 = vmatpush1.bf16.msra.mxu0 0
      %307 = vmatprep.subr.bf16.mxu0 0
      %308 = vmatpush1.bf16.msra.mxu0 0
      %309 = vmatprep.subr.bf16.mxu0 0
      %310 = vmatpush1.bf16.msra.mxu0 0
      %311 = vmatprep.subr.bf16.mxu0 0
      %312 = vmatpush1.bf16.msra.mxu0 0
      %313 = vmatprep.subr.bf16.mxu0 0
      %314 = vmatpush1.bf16.msra.mxu0 0
      %315 = vmatprep.subr.bf16.mxu0 0
      %316 = vmatpush1.bf16.msra.mxu0 0
      %317 = vmatprep.subr.bf16.mxu0 0
      %318 = vmatpush1.bf16.msra.mxu0 0
      %319 = vmatprep.subr.bf16.mxu0 0
      %320 = vmatpush1.bf16.msra.mxu0 0
      %321 = vmatprep.subr.bf16.mxu0 0
      %322 = vmatpush1.bf16.msra.mxu0 0
      %323 = vmatprep.subr.bf16.mxu0 0
      %324 = vmatpush1.bf16.msra.mxu0 0
      %325 = vmatprep.subr.bf16.mxu0 0
      %326 = vmatpush1.bf16.msra.mxu0 0
      %327 = vmatprep.subr.bf16.mxu0 0
      %328 = vmatpush1.bf16.msra.mxu0 0
      %329 = vmatprep.subr.bf16.mxu0 0
      %330 = vmatpush1.bf16.msra.mxu0 0
      %331 = vmatprep.subr.bf16.mxu0 0
      %332 = vmatpush1.bf16.msra.mxu0 0
      %333 = vmatprep.mubr.bf16.mxu0 0
      %334 = vmatmul.mubr.bf16.gmra.mrb[0].mxu0 %v289
      %v335 = vpop.f32.mrb[0].mxu0
      %v336 = vadd.f32 %v270, %v335
      %v337 = vpop.f32.mrb[0].mxu0
      %v338 = vadd.f32 %v270, %v337
      %v339 = vpop.f32.mrb[0].mxu0
      %v340 = vadd.f32 %v275, %v339
      %v341 = vpop.f32.mrb[0].mxu0
      %v342 = vadd.f32 %v275, %v341
      %343 = vmatprep.mubr.bf16.mxu0 0
      %344 = vmatmul.mubr.bf16.gmra.mrb[0].mxu0 %v292
      %v345 = vpop.f32.mrb[0].mxu0
      %v346 = vadd.f32 %v280, %v345
      %v347 = vpop.f32.mrb[0].mxu0
      %v348 = vadd.f32 %v280, %v347
      %v349 = vpop.f32.mrb[0].mxu0
      %v350 = vadd.f32 %v285, %v349
      %v351 = vpop.f32.mrb[0].mxu0
      %v352 = vadd.f32 %v285, %v351
      %353 = vdwg.mxu0
      %v354 = vmax.f32 %v336, 0.0
      %v355 = vmax.f32 %v338, 0.0
      %v356 = vmax.f32 %v340, 0.0
      %v357 = vmax.f32 %v342, 0.0
      %v358 = vmax.f32 %v346, 0.0
      %v359 = vmax.f32 %v348, 0.0
      %v360 = vmax.f32 %v350, 0.0
      %v361 = vmax.f32 %v352, 0.0
      %362 = vst [vmem:[%s251] sm:$0xff] %v354
      %363 = vst [vmem:[%s251 + $0x8] sm:$0xff] %v355
      %364 = vrot.lane.b32.xlu0 %v356, 17
      %v365 = vpop.permute.xlu0 %364
      %366 = vrot.lane.b32.xlu0 %v357, 17
      %v367 = vpop.permute.xlu0 %366
      %v368 = vlaneseq
      %v369 = vand.u32 %v368, 127
      %vm370 = vcmp.lt.s32.totalorder %v369, 17
      %v371 = vsel %vm370, %v365, %v367
      %v372 = vsel %vm370, %v367, %v365
      %v373 = vld [vmem:[%s5] sm:$0xff]
      %v374 = vld [vmem:[%s5 + $0x8] sm:$0xff]
      %v375 = vmul.f32 %v372, %v373
      %v376 = vmul.f32 %v371, %v374
      %377 = vrot.lane.b32.xlu0 %v356, 16
      %v378 = vpop.permute.xlu0 %377
      %379 = vrot.lane.b32.xlu0 %v357, 16
      %v380 = vpop.permute.xlu0 %379
      %vm381 = vcmp.lt.s32.totalorder %v369, 16
      %v382 = vsel %vm381, %v378, %v380
      %v383 = vsel %vm381, %v380, %v378
      %s384 = scalar_lea.vmem %s5, 16
      %v385 = vld [vmem:[%s384] sm:$0xff]
      %v386 = vld [vmem:[%s384 + $0x8] sm:$0xff]
      %v387 = vmul.f32 %v383, %v385
      %v388 = vmul.f32 %v382, %v386
      %389 = vrot.lane.b32.xlu0 %v356, 15
      %v390 = vpop.permute.xlu0 %389
      %391 = vrot.lane.b32.xlu0 %v357, 15
      %v392 = vpop.permute.xlu0 %391
      %vm393 = vcmp.lt.s32.totalorder %v369, 15
      %v394 = vsel %vm393, %v390, %v392
      %v395 = vsel %vm393, %v392, %v390
      %s396 = scalar_lea.vmem %s5, 32
      %v397 = vld [vmem:[%s396] sm:$0xff]
      %v398 = vld [vmem:[%s396 + $0x8] sm:$0xff]
      %v399 = vmul.f32 %v395, %v397
      %v400 = vmul.f32 %v394, %v398
      %401 = vrot.lane.b32.xlu0 %v356, 1
      %v402 = vpop.permute.xlu0 %401
      %403 = vrot.lane.b32.xlu0 %v357, 1
      %v404 = vpop.permute.xlu0 %403
      %vm405 = vcmp.lt.s32.totalorder %v369, 1
      %v406 = vsel %vm405, %v402, %v404
      %v407 = vsel %vm405, %v404, %v402
      %s408 = scalar_lea.vmem %s5, 48
      %v409 = vld [vmem:[%s408] sm:$0xff]
      %v410 = vld [vmem:[%s408 + $0x8] sm:$0xff]
      %v411 = vmul.f32 %v407, %v409
      %v412 = vmul.f32 %v406, %v410
      %s413 = scalar_lea.vmem %s5, 64
      %v414 = vld [vmem:[%s413] sm:$0xff]
      %v415 = vld [vmem:[%s413 + $0x8] sm:$0xff]
      %v416 = vmul.f32 %v356, %v414
      %v417 = vmul.f32 %v357, %v415
      %418 = vrot.lane.b32.xlu0 %v356, 127
      %v419 = vpop.permute.xlu0 %418
      %420 = vrot.lane.b32.xlu0 %v357, 127
      %v421 = vpop.permute.xlu0 %420
      %vm422 = vcmp.lt.s32.totalorder %v369, 127
      %v423 = vsel %vm422, %v419, %v421
      %v424 = vsel %vm422, %v421, %v419
      %s425 = scalar_lea.vmem %s5, 80
      %v426 = vld [vmem:[%s425] sm:$0xff]
      %v427 = vld [vmem:[%s425 + $0x8] sm:$0xff]
      %v428 = vmul.f32 %v423, %v426
      %v429 = vmul.f32 %v424, %v427
      %430 = vrot.lane.b32.xlu0 %v356, 113
      %v431 = vpop.permute.xlu0 %430
      %432 = vrot.lane.b32.xlu0 %v357, 113
      %v433 = vpop.permute.xlu0 %432
      %vm434 = vcmp.lt.s32.totalorder %v369, 113
      %v435 = vsel %vm434, %v431, %v433
      %v436 = vsel %vm434, %v433, %v431
      %s437 = scalar_lea.vmem %s5, 96
      %v438 = vld [vmem:[%s437] sm:$0xff]
      %v439 = vld [vmem:[%s437 + $0x8] sm:$0xff]
      %v440 = vmul.f32 %v435, %v438
      %v441 = vmul.f32 %v436, %v439
      %442 = vrot.lane.b32.xlu0 %v356, 112
      %v443 = vpop.permute.xlu0 %442
      %444 = vrot.lane.b32.xlu0 %v357, 112
      %v445 = vpop.permute.xlu0 %444
      %vm446 = vcmp.lt.s32.totalorder %v369, 112
      %v447 = vsel %vm446, %v443, %v445
      %v448 = vsel %vm446, %v445, %v443
      %s449 = scalar_lea.vmem %s5, 112
      %v450 = vld [vmem:[%s449] sm:$0xff]
      %v451 = vld [vmem:[%s449 + $0x8] sm:$0xff]
      %v452 = vmul.f32 %v447, %v450
      %v453 = vmul.f32 %v448, %v451
      %454 = vrot.lane.b32.xlu0 %v356, 111
      %v455 = vpop.permute.xlu0 %454
      %456 = vrot.lane.b32.xlu0 %v357, 111
      %v457 = vpop.permute.xlu0 %456
      %vm458 = vcmp.lt.s32.totalorder %v369, 111
      %v459 = vsel %vm458, %v455, %v457
      %v460 = vsel %vm458, %v457, %v455
      %s461 = scalar_lea.vmem %s5, 128
      %v462 = vld [vmem:[%s461] sm:$0xff]
      %v463 = vld [vmem:[%s461 + $0x8] sm:$0xff]
      %v464 = vmul.f32 %v459, %v462
      %v465 = vmul.f32 %v460, %v463
      %v466 = vpack.c.bf16 %v387, %v375
      %v467 = vpack.c.bf16 %v388, %v376
      %v468 = vpack.c.bf16 %v411, %v399
      %v469 = vpack.c.bf16 %v412, %v400
      %v470 = vpack.c.bf16 %v428, %v416
      %v471 = vpack.c.bf16 %v429, %v417
      %v472 = vpack.c.bf16 %v452, %v440
      %v473 = vpack.c.bf16 %v453, %v441
      %v474 = vpack.c.bf16 %v464, %v464
      %v475 = vpack.c.bf16 %v465, %v465
      %v476 = vld [vmem:[%s3] sm:$0xff]
      %v477 = vpack.c.bf16 %v476, %v476
      %v478 = vld [vmem:[%s4] sm:$0xff]
      %480 = vset.pattern.permute.xlu0 0
      %481 = vperm.xlu0 %480, %v478
      %v482 = vpop.permute.xlu0 %481
      %vm484 = vcmask 588800
      %v486 = vsel %vm484, %v477, 0
      %v489 = vsel %vm294, %v474, 0
      %v492 = vsel %vm294, %v475, 0
      %494 = vmatprep.subr.bf16.mxu0 %v467
      %495 = vmatpush1.bf16.msra.mxu0 %v466
      %496 = vmatprep.subr.bf16.mxu0 %v469
      %497 = vmatpush1.bf16.msra.mxu0 %v468
      %498 = vmatprep.subr.bf16.mxu0 %v471
      %499 = vmatpush1.bf16.msra.mxu0 %v470
      %500 = vmatprep.subr.bf16.mxu0 %v473
      %501 = vmatpush1.bf16.msra.mxu0 %v472
      %502 = vmatprep.subr.bf16.mxu0 %v492
      %503 = vmatpush1.bf16.msra.mxu0 %v489
      %504 = vmatprep.subr.bf16.mxu0 0
      %505 = vmatpush1.bf16.msra.mxu0 0
      %506 = vmatprep.subr.bf16.mxu0 0
      %507 = vmatpush1.bf16.msra.mxu0 0
      %508 = vmatprep.subr.bf16.mxu0 0
      %509 = vmatpush1.bf16.msra.mxu0 0
      %510 = vmatprep.subr.bf16.mxu0 0
      %511 = vmatpush1.bf16.msra.mxu0 0
      %512 = vmatprep.subr.bf16.mxu0 0
      %513 = vmatpush1.bf16.msra.mxu0 0
      %514 = vmatprep.subr.bf16.mxu0 0
      %515 = vmatpush1.bf16.msra.mxu0 0
      %516 = vmatprep.subr.bf16.mxu0 0
      %517 = vmatpush1.bf16.msra.mxu0 0
      %518 = vmatprep.subr.bf16.mxu0 0
      %519 = vmatpush1.bf16.msra.mxu0 0
      %520 = vmatprep.subr.bf16.mxu0 0
      %521 = vmatpush1.bf16.msra.mxu0 0
      %522 = vmatprep.subr.bf16.mxu0 0
      %523 = vmatpush1.bf16.msra.mxu0 0
      %524 = vmatprep.subr.bf16.mxu0 0
      %525 = vmatpush1.bf16.msra.mxu0 0
      %526 = vmatprep.mubr.bf16.mxu0 0
      %527 = vmatmul.mubr.bf16.gmra.mrb[0].mxu0 %v486
      %v528 = vpop.f32.mrb[0].mxu0
      %v529 = vadd.f32 %v482, %v528
      %v530 = vpop.f32.mrb[0].mxu0
      %v531 = vadd.f32 %v482, %v530
      %v532 = vpop.f32.mrb[0].mxu0
      %v533 = vpop.f32.mrb[0].mxu0
      %534 = vdwg.mxu0
      %v535 = vmax.f32 %v529, 0.0
      %v536 = vmax.f32 %v531, 0.0
      %537 = vst [vmem:[%s251 + $0x10] sm:$0xff] %v535
      %538 = vst [vmem:[%s251 + $0x18] sm:$0xff] %v536
      %539 = vrot.lane.b32.xlu0 %v358, 34
      %v540 = vpop.permute.xlu0 %539
      %541 = vrot.lane.b32.xlu0 %v359, 34
      %v542 = vpop.permute.xlu0 %541
      %vm543 = vcmp.lt.s32.totalorder %v369, 34
      %v544 = vsel %vm543, %v540, %v542
      %v545 = vsel %vm543, %v542, %v540
      %s546 = scalar_lea.vmem %s5, 144
      %v547 = vld [vmem:[%s546] sm:$0xff]
      %v548 = vld [vmem:[%s546 + $0x8] sm:$0xff]
      %v549 = vmul.f32 %v545, %v547
      %v550 = vmul.f32 %v544, %v548
      %551 = vrot.lane.b32.xlu0 %v358, 32
      %v552 = vpop.permute.xlu0 %551
      %553 = vrot.lane.b32.xlu0 %v359, 32
      %v554 = vpop.permute.xlu0 %553
      %vm555 = vcmp.lt.s32.totalorder %v369, 32
      %v556 = vsel %vm555, %v552, %v554
      %v557 = vsel %vm555, %v554, %v552
      %s558 = scalar_lea.vmem %s5, 160
      %v559 = vld [vmem:[%s558] sm:$0xff]
      %v560 = vld [vmem:[%s558 + $0x8] sm:$0xff]
      %v561 = vmul.f32 %v557, %v559
      %v562 = vmul.f32 %v556, %v560
      %563 = vrot.lane.b32.xlu0 %v358, 30
      %v564 = vpop.permute.xlu0 %563
      %565 = vrot.lane.b32.xlu0 %v359, 30
      %v566 = vpop.permute.xlu0 %565
      %vm567 = vcmp.lt.s32.totalorder %v369, 30
      %v568 = vsel %vm567, %v564, %v566
      %v569 = vsel %vm567, %v566, %v564
      %s570 = scalar_lea.vmem %s5, 176
      %v571 = vld [vmem:[%s570] sm:$0xff]
      %v572 = vld [vmem:[%s570 + $0x8] sm:$0xff]
      %v573 = vmul.f32 %v569, %v571
      %v574 = vmul.f32 %v568, %v572
      %575 = vrot.lane.b32.xlu0 %v358, 2
      %v576 = vpop.permute.xlu0 %575
      %577 = vrot.lane.b32.xlu0 %v359, 2
      %v578 = vpop.permute.xlu0 %577
      %vm579 = vcmp.lt.s32.totalorder %v369, 2
      %v580 = vsel %vm579, %v576, %v578
      %v581 = vsel %vm579, %v578, %v576
      %s582 = scalar_lea.vmem %s5, 192
      %v583 = vld [vmem:[%s582] sm:$0xff]
      %v584 = vld [vmem:[%s582 + $0x8] sm:$0xff]
      %v585 = vmul.f32 %v581, %v583
      %v586 = vmul.f32 %v580, %v584
      %s587 = scalar_lea.vmem %s5, 208
      %v588 = vld [vmem:[%s587] sm:$0xff]
      %v589 = vld [vmem:[%s587 + $0x8] sm:$0xff]
      %v590 = vmul.f32 %v358, %v588
      %v591 = vmul.f32 %v359, %v589
      %592 = vrot.lane.b32.xlu0 %v358, 126
      %v593 = vpop.permute.xlu0 %592
      %594 = vrot.lane.b32.xlu0 %v359, 126
      %v595 = vpop.permute.xlu0 %594
      %vm596 = vcmp.lt.s32.totalorder %v369, 126
      %v597 = vsel %vm596, %v593, %v595
      %v598 = vsel %vm596, %v595, %v593
      %s599 = scalar_lea.vmem %s5, 224
      %v600 = vld [vmem:[%s599] sm:$0xff]
      %v601 = vld [vmem:[%s599 + $0x8] sm:$0xff]
      %v602 = vmul.f32 %v597, %v600
      %v603 = vmul.f32 %v598, %v601
      %604 = vrot.lane.b32.xlu0 %v358, 98
      %v605 = vpop.permute.xlu0 %604
      %606 = vrot.lane.b32.xlu0 %v359, 98
      %v607 = vpop.permute.xlu0 %606
      %vm608 = vcmp.lt.s32.totalorder %v369, 98
      %v609 = vsel %vm608, %v605, %v607
      %v610 = vsel %vm608, %v607, %v605
      %s611 = scalar_lea.vmem %s5, 240
      %v612 = vld [vmem:[%s611] sm:$0xff]
      %v613 = vld [vmem:[%s611 + $0x8] sm:$0xff]
      %v614 = vmul.f32 %v609, %v612
      %v615 = vmul.f32 %v610, %v613
      %616 = vrot.lane.b32.xlu0 %v358, 96
      %v617 = vpop.permute.xlu0 %616
      %618 = vrot.lane.b32.xlu0 %v359, 96
      %v619 = vpop.permute.xlu0 %618
      %vm620 = vcmp.lt.s32.totalorder %v369, 96
      %v621 = vsel %vm620, %v617, %v619
      %v622 = vsel %vm620, %v619, %v617
      %s623 = scalar_lea.vmem %s5, 256
      %v624 = vld [vmem:[%s623] sm:$0xff]
      %v625 = vld [vmem:[%s623 + $0x8] sm:$0xff]
      %v626 = vmul.f32 %v621, %v624
      %v627 = vmul.f32 %v622, %v625
      %628 = vrot.lane.b32.xlu0 %v358, 94
      %v629 = vpop.permute.xlu0 %628
      %630 = vrot.lane.b32.xlu0 %v359, 94
      %v631 = vpop.permute.xlu0 %630
      %vm632 = vcmp.lt.s32.totalorder %v369, 94
      %v633 = vsel %vm632, %v629, %v631
      %v634 = vsel %vm632, %v631, %v629
      %s635 = scalar_lea.vmem %s5, 272
      %v636 = vld [vmem:[%s635] sm:$0xff]
      %v637 = vld [vmem:[%s635 + $0x8] sm:$0xff]
      %v638 = vmul.f32 %v633, %v636
      %v639 = vmul.f32 %v634, %v637
      %v640 = vpack.c.bf16 %v561, %v549
      %v641 = vpack.c.bf16 %v562, %v550
      %v642 = vpack.c.bf16 %v585, %v573
      %v643 = vpack.c.bf16 %v586, %v574
      %v644 = vpack.c.bf16 %v602, %v590
      %v645 = vpack.c.bf16 %v603, %v591
      %v646 = vpack.c.bf16 %v626, %v614
      %v647 = vpack.c.bf16 %v627, %v615
      %v648 = vpack.c.bf16 %v638, %v638
      %v649 = vpack.c.bf16 %v639, %v639
      %s650 = scalar_lea.vmem %s3, 8
      %v651 = vld [vmem:[%s650] sm:$0xff]
      %v652 = vpack.c.bf16 %v651, %v651
      %s653 = scalar_lea.vmem %s4, 8
      %v654 = vld [vmem:[%s653] sm:$0xff]
      %656 = vset.pattern.permute.xlu0 0
      %657 = vperm.xlu0 %656, %v654
      %v658 = vpop.permute.xlu0 %657
      %v661 = vsel %vm484, %v652, 0
      %v664 = vsel %vm294, %v648, 0
      %v667 = vsel %vm294, %v649, 0
      %669 = vmatprep.subr.bf16.mxu0 %v641
      %670 = vmatpush1.bf16.msra.mxu0 %v640
      %671 = vmatprep.subr.bf16.mxu0 %v643
      %672 = vmatpush1.bf16.msra.mxu0 %v642
      %673 = vmatprep.subr.bf16.mxu0 %v645
      %674 = vmatpush1.bf16.msra.mxu0 %v644
      %675 = vmatprep.subr.bf16.mxu0 %v647
      %676 = vmatpush1.bf16.msra.mxu0 %v646
      %677 = vmatprep.subr.bf16.mxu0 %v667
      %678 = vmatpush1.bf16.msra.mxu0 %v664
      %679 = vmatprep.subr.bf16.mxu0 0
      %680 = vmatpush1.bf16.msra.mxu0 0
      %681 = vmatprep.subr.bf16.mxu0 0
      %682 = vmatpush1.bf16.msra.mxu0 0
      %683 = vmatprep.subr.bf16.mxu0 0
      %684 = vmatpush1.bf16.msra.mxu0 0
      %685 = vmatprep.subr.bf16.mxu0 0
      %686 = vmatpush1.bf16.msra.mxu0 0
      %687 = vmatprep.subr.bf16.mxu0 0
      %688 = vmatpush1.bf16.msra.mxu0 0
      %689 = vmatprep.subr.bf16.mxu0 0
      %690 = vmatpush1.bf16.msra.mxu0 0
      %691 = vmatprep.subr.bf16.mxu0 0
      %692 = vmatpush1.bf16.msra.mxu0 0
      %693 = vmatprep.subr.bf16.mxu0 0
      %694 = vmatpush1.bf16.msra.mxu0 0
      %695 = vmatprep.subr.bf16.mxu0 0
      %696 = vmatpush1.bf16.msra.mxu0 0
      %697 = vmatprep.subr.bf16.mxu0 0
      %698 = vmatpush1.bf16.msra.mxu0 0
      %699 = vmatprep.subr.bf16.mxu0 0
      %700 = vmatpush1.bf16.msra.mxu0 0
      %701 = vmatprep.mubr.bf16.mxu0 0
      %702 = vmatmul.mubr.bf16.gmra.mrb[0].mxu0 %v661
      %v703 = vpop.f32.mrb[0].mxu0
      %v704 = vadd.f32 %v658, %v703
      %v705 = vpop.f32.mrb[0].mxu0
      %v706 = vadd.f32 %v658, %v705
      %v707 = vpop.f32.mrb[0].mxu0
      %v708 = vpop.f32.mrb[0].mxu0
      %709 = vdwg.mxu0
      %v710 = vmax.f32 %v704, 0.0
      %v711 = vmax.f32 %v706, 0.0
      %712 = vst [vmem:[%s251 + $0x20] sm:$0xff] %v710
      %713 = vst [vmem:[%s251 + $0x28] sm:$0xff] %v711
      %714 = vrot.lane.b32.xlu0 %v360, 68
      %v715 = vpop.permute.xlu0 %714
      %716 = vrot.lane.b32.xlu0 %v361, 68
      %v717 = vpop.permute.xlu0 %716
      %vm718 = vcmp.lt.s32.totalorder %v369, 68
      %v719 = vsel %vm718, %v715, %v717
      %v720 = vsel %vm718, %v717, %v715
      %s721 = scalar_lea.vmem %s5, 288
      %v722 = vld [vmem:[%s721] sm:$0xff]
      %v723 = vld [vmem:[%s721 + $0x8] sm:$0xff]
      %v724 = vmul.f32 %v720, %v722
      %v725 = vmul.f32 %v719, %v723
      %726 = vrot.lane.b32.xlu0 %v360, 64
      %v727 = vpop.permute.xlu0 %726
      %728 = vrot.lane.b32.xlu0 %v361, 64
      %v729 = vpop.permute.xlu0 %728
      %vm730 = vcmp.lt.s32.totalorder %v369, 64
      %v731 = vsel %vm730, %v727, %v729
      %v732 = vsel %vm730, %v729, %v727
      %s733 = scalar_lea.vmem %s5, 304
      %v734 = vld [vmem:[%s733] sm:$0xff]
      %v735 = vld [vmem:[%s733 + $0x8] sm:$0xff]
      %v736 = vmul.f32 %v732, %v734
      %v737 = vmul.f32 %v731, %v735
      %738 = vrot.lane.b32.xlu0 %v360, 60
      %v739 = vpop.permute.xlu0 %738
      %740 = vrot.lane.b32.xlu0 %v361, 60
      %v741 = vpop.permute.xlu0 %740
      %vm742 = vcmp.lt.s32.totalorder %v369, 60
      %v743 = vsel %vm742, %v739, %v741
      %v744 = vsel %vm742, %v741, %v739
      %s745 = scalar_lea.vmem %s5, 320
      %v746 = vld [vmem:[%s745] sm:$0xff]
      %v747 = vld [vmem:[%s745 + $0x8] sm:$0xff]
      %v748 = vmul.f32 %v744, %v746
      %v749 = vmul.f32 %v743, %v747
      %750 = vrot.lane.b32.xlu0 %v360, 4
      %v751 = vpop.permute.xlu0 %750
      %752 = vrot.lane.b32.xlu0 %v361, 4
      %v753 = vpop.permute.xlu0 %752
      %vm754 = vcmp.lt.s32.totalorder %v369, 4
      %v755 = vsel %vm754, %v751, %v753
      %v756 = vsel %vm754, %v753, %v751
      %s757 = scalar_lea.vmem %s5, 336
      %v758 = vld [vmem:[%s757] sm:$0xff]
      %v759 = vld [vmem:[%s757 + $0x8] sm:$0xff]
      %v760 = vmul.f32 %v756, %v758
      %v761 = vmul.f32 %v755, %v759
      %s762 = scalar_lea.vmem %s5, 352
      %v763 = vld [vmem:[%s762] sm:$0xff]
      %v764 = vld [vmem:[%s762 + $0x8] sm:$0xff]
      %v765 = vmul.f32 %v360, %v763
      %v766 = vmul.f32 %v361, %v764
      %767 = vrot.lane.b32.xlu0 %v360, 124
      %v768 = vpop.permute.xlu0 %767
      %769 = vrot.lane.b32.xlu0 %v361, 124
      %v770 = vpop.permute.xlu0 %769
      %vm771 = vcmp.lt.s32.totalorder %v369, 124
      %v772 = vsel %vm771, %v768, %v770
      %v773 = vsel %vm771, %v770, %v768
      %s774 = scalar_lea.vmem %s5, 368
      %v775 = vld [vmem:[%s774] sm:$0xff]
      %v776 = vld [vmem:[%s774 + $0x8] sm:$0xff]
      %v777 = vmul.f32 %v772, %v775
      %v778 = vmul.f32 %v773, %v776
      %s779 = scalar_lea.vmem %s5, 384
      %v780 = vld [vmem:[%s779] sm:$0xff]
      %v781 = vld [vmem:[%s779 + $0x8] sm:$0xff]
      %v782 = vmul.f32 %v719, %v780
      %v783 = vmul.f32 %v720, %v781
      %s784 = scalar_lea.vmem %s5, 400
      %v785 = vld [vmem:[%s784] sm:$0xff]
      %v786 = vld [vmem:[%s784 + $0x8] sm:$0xff]
      %v787 = vmul.f32 %v731, %v785
      %v788 = vmul.f32 %v732, %v786
      %s789 = scalar_lea.vmem %s5, 416
      %v790 = vld [vmem:[%s789] sm:$0xff]
      %v791 = vld [vmem:[%s789 + $0x8] sm:$0xff]
      %v792 = vmul.f32 %v743, %v790
      %v793 = vmul.f32 %v744, %v791
      %v794 = vpack.c.bf16 %v736, %v724
      %v795 = vpack.c.bf16 %v737, %v725
      %v796 = vpack.c.bf16 %v760, %v748
      %v797 = vpack.c.bf16 %v761, %v749
      %v798 = vpack.c.bf16 %v777, %v765
      %v799 = vpack.c.bf16 %v778, %v766
      %v800 = vpack.c.bf16 %v787, %v782
      %v801 = vpack.c.bf16 %v788, %v783
      %v802 = vpack.c.bf16 %v792, %v792
      %v803 = vpack.c.bf16 %v793, %v793
      %s804 = scalar_lea.vmem %s3, 16
      %v805 = vld [vmem:[%s804] sm:$0xff]
      %v806 = vpack.c.bf16 %v805, %v805
      %s807 = scalar_lea.vmem %s4, 16
      %v808 = vld [vmem:[%s807] sm:$0xff]
      %810 = vset.pattern.permute.xlu0 0
      %811 = vperm.xlu0 %810, %v808
      %v812 = vpop.permute.xlu0 %811
      %v815 = vsel %vm484, %v806, 0
      %v818 = vsel %vm294, %v802, 0
      %v821 = vsel %vm294, %v803, 0
      %823 = vmatprep.subr.bf16.mxu0 %v795
      %824 = vmatpush1.bf16.msra.mxu0 %v794
      %825 = vmatprep.subr.bf16.mxu0 %v797
      %826 = vmatpush1.bf16.msra.mxu0 %v796
      %827 = vmatprep.subr.bf16.mxu0 %v799
      %828 = vmatpush1.bf16.msra.mxu0 %v798
      %829 = vmatprep.subr.bf16.mxu0 %v801
      %830 = vmatpush1.bf16.msra.mxu0 %v800
      %831 = vmatprep.subr.bf16.mxu0 %v821
      %832 = vmatpush1.bf16.msra.mxu0 %v818
      %833 = vmatprep.subr.bf16.mxu0 0
      %834 = vmatpush1.bf16.msra.mxu0 0
      %835 = vmatprep.subr.bf16.mxu0 0
      %836 = vmatpush1.bf16.msra.mxu0 0
      %837 = vmatprep.subr.bf16.mxu0 0
      %838 = vmatpush1.bf16.msra.mxu0 0
      %839 = vmatprep.subr.bf16.mxu0 0
      %840 = vmatpush1.bf16.msra.mxu0 0
      %841 = vmatprep.subr.bf16.mxu0 0
      %842 = vmatpush1.bf16.msra.mxu0 0
      %843 = vmatprep.subr.bf16.mxu0 0
      %844 = vmatpush1.bf16.msra.mxu0 0
      %845 = vmatprep.subr.bf16.mxu0 0
      %846 = vmatpush1.bf16.msra.mxu0 0
      %847 = vmatprep.subr.bf16.mxu0 0
      %848 = vmatpush1.bf16.msra.mxu0 0
      %849 = vmatprep.subr.bf16.mxu0 0
      %850 = vmatpush1.bf16.msra.mxu0 0
      %851 = vmatprep.subr.bf16.mxu0 0
      %852 = vmatpush1.bf16.msra.mxu0 0
      %853 = vmatprep.subr.bf16.mxu0 0
      %854 = vmatpush1.bf16.msra.mxu0 0
      %855 = vmatprep.mubr.bf16.mxu0 0
      %856 = vmatmul.mubr.bf16.gmra.mrb[0].mxu0 %v815
      %v857 = vpop.f32.mrb[0].mxu0
      %v858 = vadd.f32 %v812, %v857
      %v859 = vpop.f32.mrb[0].mxu0
      %v860 = vadd.f32 %v812, %v859
      %v861 = vpop.f32.mrb[0].mxu0
      %v862 = vpop.f32.mrb[0].mxu0
      %863 = vdwg.mxu0
      %v864 = vmax.f32 %v858, 0.0
      %v865 = vmax.f32 %v860, 0.0
      %866 = vst [vmem:[%s251 + $0x30] sm:$0xff] %v864
      %867 = vst [vmem:[%s251 + $0x38] sm:$0xff] %v865
      %p868 = scmp.lt.s32.totalorder %s17, 1
      %s869 = scalar_select %p868, %s17, 1
      %s870 = smul.addr %s869, 8
      %s871 = smul.addr %s870, 8
      %s872 = scalar_lea.vmem %s6, %s871
      // Predicated region
      $region45: #{feature_pyramid_pallas.1} parent=43 // pred_check
        %p873 = pneg %p166
      $region46: #{feature_pyramid_pallas.1} parent=43 // pred_check_branch
        %875 = sbr.rel (%p873) target = $region48
      $region47: #{feature_pyramid_pallas.1} parent=43 // pred_region
        _
      $region48: #{feature_pyramid_pallas.1} parent=43 // pred_fallthru
        _
    $region44: #{feature_pyramid_pallas.1} parent=5 // pred_fallthru
      _
    %p876 = scmp.le.s32.totalorder 2, %s12
    // Predicated region
    $region49: #{feature_pyramid_pallas.1} parent=5 // pred_check
      %p877 = pneg %p876
    $region50: #{feature_pyramid_pallas.1} parent=5 // pred_check_branch
      %879 = sbr.rel (%p877) target = $region52
    $region51: #{feature_pyramid_pallas.1} parent=5 // pred_region
      %s880 = ssub.s32 %s12, 2
      // Predicated region
      $region53: #{feature_pyramid_pallas.1} parent=51 // pred_check
        %p881 = pneg %p172
      $region54: #{feature_pyramid_pallas.1} parent=51 // pred_check_branch
        %883 = sbr.rel (%p881) target = $region56
      $region55: #{feature_pyramid_pallas.1} parent=51 // pred_region
        %p884 = scmp.lt.s32.totalorder %s18, 1
        %s885 = scalar_select %p884, %s18, 1
        %s886 = smul.addr %s885, 8
        %s887 = smul.addr %s886, 8
        %s888 = scalar_lea.vmem %s6, %s887
      $region56: #{feature_pyramid_pallas.1} parent=51 // pred_fallthru
        _
    $region52: #{feature_pyramid_pallas.1} parent=5 // pred_fallthru
      _
  $region6: #{feature_pyramid_pallas.1} parent=0 // loop_footer
    %s16 = sadd.s32 1, %s12
  $region7: #{feature_pyramid_pallas.1} parent=0 // loop_footer_branch
    %11 = sbr.rel target = $region3
  $region8: #{feature_pyramid_pallas.1} parent=0 // loop_exit
    _

</llo_original>
